<compile_context>
chip_gen: v7x
topology: tpu7x:2x2x1
jax: 0.10.0
libtpu: 0.0.40
codegen_flags: <defaults>
</compile_context>

<pallas_src>
import functools

import jax
import jax.numpy as jnp
import numpy as np
from jax.experimental import pallas as pl
from jax.experimental.pallas import tpu as pltpu

_INV_SQRT2 = 0.7071067811865475
_MIB = 1 << 20


def _gelu(x, approximate=False):
    if approximate:
        # tanh form lowers to the EUP slot (useful on v5e if tolerance allows).
        return jax.nn.gelu(x, approximate=True)
    # torch.nn.GELU() default: exact erf formulation.
    return 0.5 * x * (1.0 + jax.lax.erf(x * _INV_SQRT2))


# ----------------------------- kernels ------------------------------------ #

def _mlp2_kernel(x_ref, w1_ref, b1_ref, w2_ref, b2_ref, o_ref, *, gelu_approx):
    h = jnp.dot(x_ref[...], w1_ref[...], preferred_element_type=jnp.float32)
    h = _gelu(h + b1_ref[...], gelu_approx)
    y = jnp.dot(h.astype(w2_ref.dtype), w2_ref[...],
                preferred_element_type=jnp.float32)
    o_ref[...] = (y + b2_ref[...]).astype(o_ref.dtype)


def _mlp3_kernel(x_ref, w1_ref, b1_ref, w2_ref, b2_ref, w3_ref, b3_ref, o_ref,
                 *, gelu_approx):
    h = jnp.dot(x_ref[...], w1_ref[...], preferred_element_type=jnp.float32)
    h = _gelu(h + b1_ref[...], gelu_approx)
    h = jnp.dot(h.astype(w2_ref.dtype), w2_ref[...],
                preferred_element_type=jnp.float32)
    h = _gelu(h + b2_ref[...], gelu_approx)
    y = jnp.dot(h.astype(w3_ref.dtype), w3_ref[...],
                preferred_element_type=jnp.float32)
    o_ref[...] = (y + b3_ref[...]).astype(o_ref.dtype)


# ----------------------------- helpers ------------------------------------ #

def _round_up(x, m):
    return (x + m - 1) // m * m


def _pad_axis(a, axis, new_size):
    pad = new_size - a.shape[axis]
    if pad <= 0:
        return a
    widths = [(0, 0)] * a.ndim
    widths[axis] = (0, pad)
    return jnp.pad(a, widths)


def _const_spec(shape, single_buffer):
    index_map = lambda i: (0,) * len(shape)
    if single_buffer:
        # Block index never changes -> one resident copy suffices; halves the
        # VMEM cost of the weights vs. default double-buffering.
        return pl.BlockSpec(shape, index_map, pipeline_mode=pl.Buffered(1))
    return pl.BlockSpec(shape, index_map)


# ----------------------------- wrapper ------------------------------------ #

def s2a_mask_projector(mask_patches, params, use_fused_vision_backbone, *,
                       compute_dtype=jnp.bfloat16, tile_m=None,
                       gelu_approx=False, vmem_budget_bytes=48 * _MIB):
    """Pallas implementation of S2AMaskProjector.forward.

    mask_patches: [..., vision_dim] float array.
    params: dict of (in, out)-layout weights and (1, out) biases.
    """
    orig_shape = mask_patches.shape
    vision_dim = orig_shape[-1]
    M = int(np.prod(orig_shape[:-1])) if len(orig_shape) > 1 else 1
    x2 = mask_patches.reshape(M, vision_dim).astype(compute_dtype)

    if not use_fused_vision_backbone:
        layers = [(params["w1"], params["b1"]),
                  (params["w_last"], params["b_last"])]
    else:
        layers = [(params["w1"], params["b1"]),
                  (params["w2"], params["b2"]),
                  (params["w_last"], params["b_last"])]
    llm_dim = layers[-1][0].shape[1]

    # Zero-pad every layer's output dim (and the next layer's input dim) to a
    # multiple of 128: stores become lane-dense (no vst.msk) and MXU N passes
    # are full.  gelu(0)=0 and zero weight rows keep the math identical.
    padded = []
    in_dim = vision_dim
    for w, b in layers:
        out_p = _round_up(w.shape[1], 128)
        w = _pad_axis(_pad_axis(w, 0, in_dim), 1, out_p)
        b = _pad_axis(jnp.reshape(b, (1, -1)), 1, out_p)
        padded.append((w.astype(compute_dtype), b.astype(jnp.float32)))
        in_dim = out_p
    out_dim_p = in_dim

    # ---- tile_m selection against an explicit VMEM budget ----
    wb_bytes = sum(int(w.size) * np.dtype(w.dtype).itemsize + int(b.size) * 4
                   for w, b in padded) * 2          # conservative: 2 buffers
    in_sz = np.dtype(compute_dtype).itemsize
    out_sz = np.dtype(mask_patches.dtype).itemsize
    hidden_max = max(w.shape[1] for w, _ in padded)

    def footprint(tm):
        act = 2 * tm * vision_dim * in_sz           # double-buffered input tile
        act += 2 * tm * out_dim_p * out_sz          # double-buffered output tile
        act += 2 * tm * hidden_max * 4              # f32 intermediates
        return act + wb_bytes

    if tile_m is None:
        m_rounded = _round_up(max(M, 1), 8)
        tile_m = min(512, m_rounded)
        # Keep >= 2 grid steps when there is plenty of work so the single
        # "parallel" axis can shard across v7x's two TensorCores.
        if m_rounded >= 512:
            tile_m = min(tile_m, _round_up(-(-m_rounded // 2), 8))
        while tile_m > 8 and footprint(tile_m) > vmem_budget_bytes:
            tile_m = _round_up(tile_m // 2, 8)
    assert tile_m % 8 == 0, "tile_m must be a multiple of 8"

    vmem_limit = int(min(max(footprint(tile_m) * 5 // 4, 32 * _MIB), 64 * _MIB))
    grid = (pl.cdiv(M, tile_m),)                    # no jnp.pad row copy

    kernel = functools.partial(
        _mlp2_kernel if len(padded) == 2 else _mlp3_kernel,
        gelu_approx=gelu_approx)
    flat_wb = [t for pair in padded for t in pair]

    def run(single_buffer_weights):
        in_specs = [pl.BlockSpec((tile_m, vision_dim), lambda i: (i, 0))]
        in_specs += [_const_spec(t.shape, single_buffer_weights)
                     for t in flat_wb]
        out = pl.pallas_call(
            kernel,
            out_shape=jax.ShapeDtypeStruct((M, out_dim_p), mask_patches.dtype),
            grid_spec=pltpu.PrefetchScalarGridSpec(
                num_scalar_prefetch=0,
                grid=grid,
                in_specs=in_specs,
                out_specs=pl.BlockSpec((tile_m, out_dim_p), lambda i: (i, 0)),
            ),
            compiler_params=pltpu.CompilerParams(
                dimension_semantics=("parallel",),
                vmem_limit_bytes=vmem_limit,
            ),
        )(x2, *flat_wb)
        return jax.block_until_ready(out)

    try:
        out = run(True)            # single-buffered resident weights
    except Exception:              # fall back if Buffered(1) is unsupported
        out = run(False)

    out = out[:, :llm_dim]
    return out.reshape(orig_shape[:-1] + (llm_dim,))


# ----------------------- params / reference / test ------------------------- #

def init_params(key, vision_dim, llm_dim, use_fused_vision_backbone):
    """Deterministic synthetic parameters, (in_dim, out_dim) weight layout."""
    keys = jax.random.split(key, 6)
    s = 0.02
    if not use_fused_vision_backbone:
        return {
            "w1": s * jax.random.normal(keys[0], (vision_dim, llm_dim), jnp.float32),
            "b1": s * jax.random.normal(keys[1], (1, llm_dim), jnp.float32),
            "w_last": s * jax.random.normal(keys[2], (llm_dim, llm_dim), jnp.float32),
            "b_last": s * jax.random.normal(keys[3], (1, llm_dim), jnp.float32),
        }
    mid = 4 * vision_dim
    return {
        "w1": s * jax.random.normal(keys[0], (vision_dim, mid), jnp.float32),
        "b1": s * jax.random.normal(keys[1], (1, mid), jnp.float32),
        "w2": s * jax.random.normal(keys[2], (mid, llm_dim), jnp.float32),
        "b2": s * jax.random.normal(keys[3], (1, llm_dim), jnp.float32),
        "w_last": s * jax.random.normal(keys[4], (llm_dim, llm_dim), jnp.float32),
        "b_last": s * jax.random.normal(keys[5], (1, llm_dim), jnp.float32),
    }


def reference(mask_patches, params, use_fused_vision_backbone):
    x = mask_patches.astype(jnp.float32)
    hp = jax.lax.Precision.HIGHEST
    h = jnp.dot(x, params["w1"], precision=hp) + params["b1"]
    h = _gelu(h)
    if not use_fused_vision_backbone:
        y = jnp.dot(h, params["w_last"], precision=hp) + params["b_last"]
        return y.astype(mask_patches.dtype)
    h = jnp.dot(h, params["w2"], precision=hp) + params["b2"]
    h = _gelu(h)
    y = jnp.dot(h, params["w_last"], precision=hp) + params["b_last"]
    return y.astype(mask_patches.dtype)


if __name__ == "__main__":
    key = jax.random.PRNGKey(0)
    k_in, k_p1, k_p2 = jax.random.split(key, 3)

    # Small shapes: batch=2, seq=8 mask patches, vision_dim=32, llm_dim=64.
    B, S, vision_dim, llm_dim = 2, 8, 32, 64
    mask_patches = jax.random.normal(k_in, (B, S, vision_dim), jnp.float32)

    ok = True
    for use_fused, kp in ((False, k_p1), (True, k_p2)):
        params = init_params(kp, vision_dim, llm_dim, use_fused)
        ref = np.asarray(reference(mask_patches, params, use_fused))

        # bf16 MXU path (production default): f32 accumulation, looser tolerance.
        out_bf16 = jax.block_until_ready(
            s2a_mask_projector(mask_patches, params, use_fused))
        # f32 operand path: tight check against the f32 reference.
        out_f32 = jax.block_until_ready(
            s2a_mask_projector(mask_patches, params, use_fused,
                               compute_dtype=jnp.float32))

        assert out_bf16.shape == (B, S, llm_dim), out_bf16.shape
        assert out_f32.shape == (B, S, llm_dim), out_f32.shape
        if not np.allclose(np.asarray(out_f32), ref, atol=1e-4, rtol=1e-3):
            ok = False
        if not np.allclose(np.asarray(out_bf16), ref, atol=5e-3, rtol=5e-2):
            ok = False

    if ok:
        print("KERNEL_OK")
</pallas_src>

<mosaic_0001>
module attributes {stable_mosaic.version = 11 : i64} {
  func.func @_mlp2_kernel(%arg0: i32, %arg1: memref<16x32xbf16, #tpu.memory_space<vmem>>, %arg2: memref<32x128xbf16, #tpu.memory_space<vmem>>, %arg3: memref<1x128xf32, #tpu.memory_space<vmem>>, %arg4: memref<128x128xbf16, #tpu.memory_space<vmem>>, %arg5: memref<1x128xf32, #tpu.memory_space<vmem>>, %arg6: memref<16x128xf32, #tpu.memory_space<vmem>>) attributes {dimension_semantics = [#tpu.dimension_semantics<parallel>], iteration_bounds = array<i64: 1>, scalar_prefetch = 0 : i64, scratch_operands = 0 : i64, tpu.core_type = #tpu.core_type<tc>, window_params = [{transform_indices = @transform_0, window_bounds = array<i64: 16, 32>}, {pipeline_mode = #tpu.pipeline_mode<synchronous>, transform_indices = @transform_1, window_bounds = array<i64: 32, 128>}, {pipeline_mode = #tpu.pipeline_mode<synchronous>, transform_indices = @transform_2, window_bounds = array<i64: 1, 128>}, {pipeline_mode = #tpu.pipeline_mode<synchronous>, transform_indices = @transform_3, window_bounds = array<i64: 128, 128>}, {pipeline_mode = #tpu.pipeline_mode<synchronous>, transform_indices = @transform_4, window_bounds = array<i64: 1, 128>}, {transform_indices = @transform_5, window_bounds = array<i64: 16, 128>}]} {
    %c0 = arith.constant 0 : index
    %c0_0 = arith.constant 0 : index
    %0 = vector.load %arg1[%c0, %c0_0] : memref<16x32xbf16, #tpu.memory_space<vmem>>, vector<16x32xbf16>
    %c0_1 = arith.constant 0 : index
    %c0_2 = arith.constant 0 : index
    %1 = vector.load %arg2[%c0_1, %c0_2] : memref<32x128xbf16, #tpu.memory_space<vmem>>, vector<32x128xbf16>
    %cst = arith.constant dense<0.000000e+00> : vector<16x128xf32>
    %2 = tpu.matmul %0, %1, %cst {dimension_numbers = #tpu.dot_dimension_numbers<[1], [0], [0], [1], [0, 0, 1, 1], [], []>} : vector<16x32xbf16>, vector<32x128xbf16>, vector<16x128xf32> -> vector<16x128xf32>
    %c0_3 = arith.constant 0 : index
    %c0_4 = arith.constant 0 : index
    %3 = vector.load %arg3[%c0_3, %c0_4] : memref<1x128xf32, #tpu.memory_space<vmem>>, vector<1x128xf32>
    %4 = vector.broadcast %3 : vector<1x128xf32> to vector<16x128xf32>
    %5 = arith.addf %2, %4 : vector<16x128xf32>
    %cst_5 = arith.constant 5.000000e-01 : f32
    %6 = vector.broadcast %cst_5 : f32 to vector<16x128xf32>
    %7 = arith.mulf %6, %5 : vector<16x128xf32>
    %cst_6 = arith.constant 0.707106769 : f32
    %8 = vector.broadcast %cst_6 : f32 to vector<16x128xf32>
    %9 = arith.mulf %5, %8 : vector<16x128xf32>
    %10 = math.erf %9 : vector<16x128xf32>
    %cst_7 = arith.constant 1.000000e+00 : f32
    %11 = vector.broadcast %cst_7 : f32 to vector<16x128xf32>
    %12 = arith.addf %11, %10 : vector<16x128xf32>
    %13 = arith.mulf %7, %12 : vector<16x128xf32>
    %14 = arith.truncf %13 : vector<16x128xf32> to vector<16x128xbf16>
    %c0_8 = arith.constant 0 : index
    %c0_9 = arith.constant 0 : index
    %15 = vector.load %arg4[%c0_8, %c0_9] : memref<128x128xbf16, #tpu.memory_space<vmem>>, vector<128x128xbf16>
    %cst_10 = arith.constant dense<0.000000e+00> : vector<16x128xf32>
    %16 = tpu.matmul %14, %15, %cst_10 {dimension_numbers = #tpu.dot_dimension_numbers<[1], [0], [0], [1], [0, 0, 1, 1], [], []>} : vector<16x128xbf16>, vector<128x128xbf16>, vector<16x128xf32> -> vector<16x128xf32>
    %c0_11 = arith.constant 0 : index
    %c0_12 = arith.constant 0 : index
    %17 = vector.load %arg5[%c0_11, %c0_12] : memref<1x128xf32, #tpu.memory_space<vmem>>, vector<1x128xf32>
    %18 = vector.broadcast %17 : vector<1x128xf32> to vector<16x128xf32>
    %19 = arith.addf %16, %18 : vector<16x128xf32>
    %c0_13 = arith.constant 0 : index
    %c0_14 = arith.constant 0 : index
    %20 = vector.load %arg6[%c0_13, %c0_14] : memref<16x128xf32, #tpu.memory_space<vmem>>, vector<16x128xf32>
    tpu.vector_store %arg6[%c0_13, %c0_14], %19 {strides = array<i32>} : memref<16x128xf32, #tpu.memory_space<vmem>>, vector<16x128xf32>,
    return
  }
  func.func @transform_0(%arg0: i32) -> (i32, i32) {
    %c0_i32 = arith.constant 0 : i32
    %c0_i32_0 = arith.constant 0 : i32
    return %arg0, %c0_i32 : i32, i32
  }
  func.func @transform_1(%arg0: i32) -> (i32, i32) {
    %c0_i32 = arith.constant 0 : i32
    %c0_i32_0 = arith.constant 0 : i32
    %c0_i32_1 = arith.constant 0 : i32
    return %c0_i32, %c0_i32_0 : i32, i32
  }
  func.func @transform_2(%arg0: i32) -> (i32, i32) {
    %c0_i32 = arith.constant 0 : i32
    %c0_i32_0 = arith.constant 0 : i32
    %c0_i32_1 = arith.constant 0 : i32
    return %c0_i32, %c0_i32_0 : i32, i32
  }
  func.func @transform_3(%arg0: i32) -> (i32, i32) {
    %c0_i32 = arith.constant 0 : i32
    %c0_i32_0 = arith.constant 0 : i32
    %c0_i32_1 = arith.constant 0 : i32
    return %c0_i32, %c0_i32_0 : i32, i32
  }
  func.func @transform_4(%arg0: i32) -> (i32, i32) {
    %c0_i32 = arith.constant 0 : i32
    %c0_i32_0 = arith.constant 0 : i32
    %c0_i32_1 = arith.constant 0 : i32
    return %c0_i32, %c0_i32_0 : i32, i32
  }
  func.func @transform_5(%arg0: i32) -> (i32, i32) {
    %c0_i32 = arith.constant 0 : i32
    %c0_i32_0 = arith.constant 0 : i32
    return %arg0, %c0_i32 : i32, i32
  }
}

module attributes {stable_mosaic.version = 11 : i64} {
  func.func @_mlp2_kernel(%arg0: i32, %arg1: memref<16x32xbf16, #tpu.memory_space<vmem>>, %arg2: memref<32x128xbf16, #tpu.memory_space<vmem>>, %arg3: memref<1x128xf32, #tpu.memory_space<vmem>>, %arg4: memref<128x128xbf16, #tpu.memory_space<vmem>>, %arg5: memref<1x128xf32, #tpu.memory_space<vmem>>, %arg6: memref<16x128xf32, #tpu.memory_space<vmem>>) attributes {dimension_semantics = [#tpu.dimension_semantics<parallel>], iteration_bounds = array<i64: 1>, scalar_prefetch = 0 : i64, scratch_operands = 0 : i64, tpu.core_type = #tpu.core_type<tc>, window_params = [{transform_indices = @transform_0, window_bounds = array<i64: 16, 32>}, {pipeline_mode = #tpu.pipeline_mode<synchronous>, transform_indices = @transform_1, window_bounds = array<i64: 32, 128>}, {pipeline_mode = #tpu.pipeline_mode<synchronous>, transform_indices = @transform_2, window_bounds = array<i64: 1, 128>}, {pipeline_mode = #tpu.pipeline_mode<synchronous>, transform_indices = @transform_3, window_bounds = array<i64: 128, 128>}, {pipeline_mode = #tpu.pipeline_mode<synchronous>, transform_indices = @transform_4, window_bounds = array<i64: 1, 128>}, {transform_indices = @transform_5, window_bounds = array<i64: 16, 128>}]} {
    %c0 = arith.constant 0 : index
    %c0_0 = arith.constant 0 : index
    %0 = vector.load %arg1[%c0, %c0_0] : memref<16x32xbf16, #tpu.memory_space<vmem>>, vector<16x32xbf16>
    %c0_1 = arith.constant 0 : index
    %c0_2 = arith.constant 0 : index
    %1 = vector.load %arg2[%c0_1, %c0_2] : memref<32x128xbf16, #tpu.memory_space<vmem>>, vector<32x128xbf16>
    %cst = arith.constant dense<0.000000e+00> : vector<16x128xf32>
    %2 = tpu.matmul %0, %1, %cst {dimension_numbers = #tpu.dot_dimension_numbers<[1], [0], [0], [1], [0, 0, 1, 1], [], []>} : vector<16x32xbf16>, vector<32x128xbf16>, vector<16x128xf32> -> vector<16x128xf32>
    %c0_3 = arith.constant 0 : index
    %c0_4 = arith.constant 0 : index
    %3 = vector.load %arg3[%c0_3, %c0_4] : memref<1x128xf32, #tpu.memory_space<vmem>>, vector<1x128xf32>
    %4 = vector.broadcast %3 : vector<1x128xf32> to vector<16x128xf32>
    %5 = arith.addf %2, %4 : vector<16x128xf32>
    %cst_5 = arith.constant 5.000000e-01 : f32
    %6 = vector.broadcast %cst_5 : f32 to vector<16x128xf32>
    %7 = arith.mulf %6, %5 : vector<16x128xf32>
    %cst_6 = arith.constant 0.707106769 : f32
    %8 = vector.broadcast %cst_6 : f32 to vector<16x128xf32>
    %9 = arith.mulf %5, %8 : vector<16x128xf32>
    %10 = math.erf %9 : vector<16x128xf32>
    %cst_7 = arith.constant 1.000000e+00 : f32
    %11 = vector.broadcast %cst_7 : f32 to vector<16x128xf32>
    %12 = arith.addf %11, %10 : vector<16x128xf32>
    %13 = arith.mulf %7, %12 : vector<16x128xf32>
    %14 = arith.truncf %13 : vector<16x128xf32> to vector<16x128xbf16>
    %c0_8 = arith.constant 0 : index
    %c0_9 = arith.constant 0 : index
    %15 = vector.load %arg4[%c0_8, %c0_9] : memref<128x128xbf16, #tpu.memory_space<vmem>>, vector<128x128xbf16>
    %cst_10 = arith.constant dense<0.000000e+00> : vector<16x128xf32>
    %16 = tpu.matmul %14, %15, %cst_10 {dimension_numbers = #tpu.dot_dimension_numbers<[1], [0], [0], [1], [0, 0, 1, 1], [], []>} : vector<16x128xbf16>, vector<128x128xbf16>, vector<16x128xf32> -> vector<16x128xf32>
    %c0_11 = arith.constant 0 : index
    %c0_12 = arith.constant 0 : index
    %17 = vector.load %arg5[%c0_11, %c0_12] : memref<1x128xf32, #tpu.memory_space<vmem>>, vector<1x128xf32>
    %18 = vector.broadcast %17 : vector<1x128xf32> to vector<16x128xf32>
    %19 = arith.addf %16, %18 : vector<16x128xf32>
    %c0_13 = arith.constant 0 : index
    %c0_14 = arith.constant 0 : index
    %20 = vector.load %arg6[%c0_13, %c0_14] : memref<16x128xf32, #tpu.memory_space<vmem>>, vector<16x128xf32>
    tpu.vector_store %arg6[%c0_13, %c0_14], %19 {strides = array<i32>} : memref<16x128xf32, #tpu.memory_space<vmem>>, vector<16x128xf32>,
    return
  }
  func.func @transform_0(%arg0: i32) -> (i32, i32) {
    %c0_i32 = arith.constant 0 : i32
    %c0_i32_0 = arith.constant 0 : i32
    return %arg0, %c0_i32 : i32, i32
  }
  func.func @transform_1(%arg0: i32) -> (i32, i32) {
    %c0_i32 = arith.constant 0 : i32
    %c0_i32_0 = arith.constant 0 : i32
    %c0_i32_1 = arith.constant 0 : i32
    return %c0_i32, %c0_i32_0 : i32, i32
  }
  func.func @transform_2(%arg0: i32) -> (i32, i32) {
    %c0_i32 = arith.constant 0 : i32
    %c0_i32_0 = arith.constant 0 : i32
    %c0_i32_1 = arith.constant 0 : i32
    return %c0_i32, %c0_i32_0 : i32, i32
  }
  func.func @transform_3(%arg0: i32) -> (i32, i32) {
    %c0_i32 = arith.constant 0 : i32
    %c0_i32_0 = arith.constant 0 : i32
    %c0_i32_1 = arith.constant 0 : i32
    return %c0_i32, %c0_i32_0 : i32, i32
  }
  func.func @transform_4(%arg0: i32) -> (i32, i32) {
    %c0_i32 = arith.constant 0 : i32
    %c0_i32_0 = arith.constant 0 : i32
    %c0_i32_1 = arith.constant 0 : i32
    return %c0_i32, %c0_i32_0 : i32, i32
  }
  func.func @transform_5(%arg0: i32) -> (i32, i32) {
    %c0_i32 = arith.constant 0 : i32
    %c0_i32_0 = arith.constant 0 : i32
    return %arg0, %c0_i32 : i32, i32
  }
}

</mosaic_0001>

<llo_original>
// kernel: tpu_custom_call.1
$region0: #{tpu_custom_call.1}
  #allocation0 [shape = 'u32[]', space=smem, size = 0x4, offset = 0x4, fixed_abs, tag = 'smem constant byte address 0x4 - core index']
  #allocation1 [shape = 'u32[144,128]{1,0:T(1,128)}', space=vmem, size = 0x12000, scoped, tag = 'internal scratch']
  %s0 = inlined_call_operand.hbm [shape: bf16[16,32], index: 0, kind: input, shape index: {}]
  %s1 = inlined_call_operand.hbm [shape: bf16[32,128], index: 1, kind: input, shape index: {}]
  %s2 = inlined_call_operand.vmem [shape: f32[1,128], index: 2, kind: input, shape index: {}]
  %s3 = inlined_call_operand.hbm [shape: bf16[128,128], index: 3, kind: input, shape index: {}]
  %s4 = inlined_call_operand.vmem [shape: f32[1,128], index: 4, kind: input, shape index: {}]
  %s5 = inlined_call_operand.hbm [shape: f32[16,128], index: 5, kind: output, shape index: {}]
  %s6 = sld [smem:[#allocation0]]
  $region42: #{tpu_custom_call.1} parent=0
    _
  %s8 = ssub.s32 1, %s6
  %s9 = scalar_select 0, %s8, %s6
  $region1: #{tpu_custom_call.1} parent=0
    #allocation2 [shape = 'u8[4096]{0}', space=vmem, size = 0x1000, scoped, tag = 'input window, operand 0, single buffered']
    #allocation3 [shape = 's32[1]{0}', space=sflag, size = 0x4, scoped, tag = 'scoped memory for tpu_custom_call.1']
    #allocation4 [shape = 's32[1]{0}', space=sflag, size = 0x4, scoped, tag = 'scoped memory for tpu_custom_call.1']
    #allocation5 [shape = 'u8[8192]{0}', space=vmem, size = 0x2000, scoped, tag = 'input window, operand 1, single buffered']
    #allocation6 [shape = 's32[1]{0}', space=sflag, size = 0x4, scoped, tag = 'scoped memory for tpu_custom_call.1']
    #allocation7 [shape = 'u8[32768]{0}', space=vmem, size = 0x8000, scoped, tag = 'input window, operand 3, single buffered']
    #allocation8 [shape = 'u8[8192]{0}', space=vmem, size = 0x2000, scoped, tag = 'output window, operand 0, single buffered']
    %10 = vsyncpa [#allocation3], 0
    %11 = vsyncpa [#allocation6], 0
    %12 = vsyncpa [#allocation4], 0
    // Predicated region
    $region2: #{tpu_custom_call.1} parent=1 // pred_check
      _
    $region3: #{tpu_custom_call.1} parent=1 // pred_check_branch
      %14 = sbr.rel (0) target = $region5
    $region4: #{tpu_custom_call.1} parent=1 // pred_region
      %s16 = ssub.s32 128, 128
      %17 = vsyncadd [#allocation3], %s16
      %s18 = sshll.u32 [#allocation2], 4
      %s19 = int_to_ptr.vmem [resolvable:$true] %s18
      %24 = dma.hbm_to_vmem [thread:$0]  %s0, 128, %s19, [#allocation3], 64, 64, 4
    $region5: #{tpu_custom_call.1} parent=1 // pred_fallthru
      _
    // Predicated region
    $region6: #{tpu_custom_call.1} parent=1 // pred_check
      _
    $region7: #{tpu_custom_call.1} parent=1 // pred_check_branch
      %26 = sbr.rel (0) target = $region9
    $region8: #{tpu_custom_call.1} parent=1 // pred_region
      %s28 = ssub.s32 256, 256
      %29 = vsyncadd [#allocation6], %s28
      %s30 = sshll.u32 [#allocation5], 4
      %s31 = int_to_ptr.vmem [resolvable:$true] %s30
      %36 = dma.hbm_to_vmem [thread:$0]  %s1, 256, %s31, [#allocation6], 64, 64, 4
    $region9: #{tpu_custom_call.1} parent=1 // pred_fallthru
      _
    // Predicated region
    $region10: #{tpu_custom_call.1} parent=1 // pred_check
      _
    $region11: #{tpu_custom_call.1} parent=1 // pred_check_branch
      %38 = sbr.rel (0) target = $region13
    $region12: #{tpu_custom_call.1} parent=1 // pred_region
      _
    $region13: #{tpu_custom_call.1} parent=1 // pred_fallthru
      _
    // Predicated region
    $region14: #{tpu_custom_call.1} parent=1 // pred_check
      _
    $region15: #{tpu_custom_call.1} parent=1 // pred_check_branch
      %40 = sbr.rel (0) target = $region17
    $region16: #{tpu_custom_call.1} parent=1 // pred_region
      %s42 = ssub.s32 1024, 1024
      %43 = vsyncadd [#allocation6], %s42
      %s44 = sshll.u32 [#allocation7], 4
      %s45 = int_to_ptr.vmem [resolvable:$true] %s44
      %50 = dma.hbm_to_vmem [thread:$0]  %s3, 1024, %s45, [#allocation6], 64, 64, 4
    $region17: #{tpu_custom_call.1} parent=1 // pred_fallthru
      _
    // Predicated region
    $region18: #{tpu_custom_call.1} parent=1 // pred_check
      _
    $region19: #{tpu_custom_call.1} parent=1 // pred_check_branch
      %52 = sbr.rel (0) target = $region21
    $region20: #{tpu_custom_call.1} parent=1 // pred_region
      _
    $region21: #{tpu_custom_call.1} parent=1 // pred_fallthru
      _
    // Predicated region
    $region22: #{tpu_custom_call.1} parent=1 // pred_check
      _
    $region23: #{tpu_custom_call.1} parent=1 // pred_check_branch
      %54 = sbr.rel (0) target = $region25
    $region24: #{tpu_custom_call.1} parent=1 // pred_region
      %55 = dma.done [#allocation3], 128
    $region25: #{tpu_custom_call.1} parent=1 // pred_fallthru
      _
    // Predicated region
    $region26: #{tpu_custom_call.1} parent=1 // pred_check
      _
    $region27: #{tpu_custom_call.1} parent=1 // pred_check_branch
      %57 = sbr.rel (0) target = $region29
    $region28: #{tpu_custom_call.1} parent=1 // pred_region
      %58 = dma.done [#allocation6], 256
    $region29: #{tpu_custom_call.1} parent=1 // pred_fallthru
      _
    // Predicated region
    $region30: #{tpu_custom_call.1} parent=1 // pred_check
      _
    $region31: #{tpu_custom_call.1} parent=1 // pred_check_branch
      %60 = sbr.rel (0) target = $region33
    $region32: #{tpu_custom_call.1} parent=1 // pred_region
      %61 = dma.done [#allocation6], 1024
    $region33: #{tpu_custom_call.1} parent=1 // pred_fallthru
      _
    %v63 = vld [vmem:[#allocation2] sm:$0xf]
    %v64 = vld [vmem:[#allocation2 + $0x4] sm:$0xf]
    %v65 = vld [vmem:[#allocation5] sm:$0xf]
    %v66 = vld [vmem:[#allocation5 + $0x4] sm:$0xf]
    %v67 = vld [vmem:[#allocation5 + $0x8] sm:$0xf]
    %v68 = vld [vmem:[#allocation5 + $0xc] sm:$0xf]
    %v69 = vld [vmem:[%s2] sm:$0x1]
    %v71 = vlaneseq
    %v72 = vshrl.u32 %v71, 7
    %v73 = vsub.s32 0, %v72
    %v74 = vrot.slane %v69, %v73
    %v78 = vunpack.c.l.b16 %v63
    %v79 = vunpack.c.l.b16 %v64
    %v80 = vpack.c.b16 %v79, %v78
    %v85 = vunpack.c.l.b16 %v65
    %v86 = vunpack.c.l.b16 %v66
    %v87 = vunpack.c.l.b16 %v67
    %v88 = vunpack.c.l.b16 %v68
    %v89 = vpack.c.b16 %v86, %v85
    %v90 = vpack.c.b16 %v88, %v87
    %vm93 = vcmask 261120
    %v95 = vsel %vm93, %v80, 0
    %97 = vmatprep.subr.bf16.mxu0 0
    %98 = vmatpush1.bf16.msra.mxu0 %v89
    %99 = vmatprep.subr.bf16.mxu0 0
    %100 = vmatpush1.bf16.msra.mxu0 %v90
    %101 = vmatprep.subr.bf16.mxu0 0
    %102 = vmatpush1.bf16.msra.mxu0 0
    %103 = vmatprep.subr.bf16.mxu0 0
    %104 = vmatpush1.bf16.msra.mxu0 0
    %105 = vmatprep.subr.bf16.mxu0 0
    %106 = vmatpush1.bf16.msra.mxu0 0
    %107 = vmatprep.subr.bf16.mxu0 0
    %108 = vmatpush1.bf16.msra.mxu0 0
    %109 = vmatprep.subr.bf16.mxu0 0
    %110 = vmatpush1.bf16.msra.mxu0 0
    %111 = vmatprep.subr.bf16.mxu0 0
    %112 = vmatpush1.bf16.msra.mxu0 0
    %113 = vmatprep.subr.bf16.mxu0 0
    %114 = vmatpush1.bf16.msra.mxu0 0
    %115 = vmatprep.subr.bf16.mxu0 0
    %116 = vmatpush1.bf16.msra.mxu0 0
    %117 = vmatprep.subr.bf16.mxu0 0
    %118 = vmatpush1.bf16.msra.mxu0 0
    %119 = vmatprep.subr.bf16.mxu0 0
    %120 = vmatpush1.bf16.msra.mxu0 0
    %121 = vmatprep.subr.bf16.mxu0 0
    %122 = vmatpush1.bf16.msra.mxu0 0
    %123 = vmatprep.subr.bf16.mxu0 0
    %124 = vmatpush1.bf16.msra.mxu0 0
    %125 = vmatprep.subr.bf16.mxu0 0
    %126 = vmatpush1.bf16.msra.mxu0 0
    %127 = vmatprep.subr.bf16.mxu0 0
    %128 = vmatpush1.bf16.msra.mxu0 0
    %129 = vmatprep.mubr.bf16.mxu0 0
    %130 = vmatmul.mubr.bf16.gmra.mrb[0].mxu0 %v95
    %v131 = vpop.f32.mrb[0].mxu0
    %v132 = vadd.f32 %v74, %v131
    %v133 = vpop.f32.mrb[0].mxu0
    %v134 = vpop.f32.mrb[0].mxu0
    %v135 = vadd.f32 %v74, %v134
    %v136 = vpop.f32.mrb[0].mxu0
    %137 = vdwg.mxu0
    %v138 = vmul.f32 %v132, 0.5
    %v139 = vmul.f32 %v135, 0.5
    %v140 = vmul.f32 %v132, 0.70710677
    %v141 = vmul.f32 %v135, 0.70710677
    %v142 = verf.f32.pop %v140
    %v143 = verf.f32.pop %v141
    %v144 = vadd.f32 %v142, 1.0
    %v145 = vadd.f32 %v143, 1.0
    %v146 = vmul.f32 %v138, %v144
    %v147 = vmul.f32 %v139, %v145
    %v148 = vpack.c.bf16 %v147, %v146
    %v149 = vld [vmem:[#allocation7] sm:$0xf]
    %v150 = vld [vmem:[#allocation7 + $0x4] sm:$0xf]
    %v151 = vld [vmem:[#allocation7 + $0x8] sm:$0xf]
    %v152 = vld [vmem:[#allocation7 + $0xc] sm:$0xf]
    %v153 = vld [vmem:[#allocation7 + $0x10] sm:$0xf]
    %v154 = vld [vmem:[#allocation7 + $0x14] sm:$0xf]
    %v155 = vld [vmem:[#allocation7 + $0x18] sm:$0xf]
    %v156 = vld [vmem:[#allocation7 + $0x1c] sm:$0xf]
    %v157 = vld [vmem:[#allocation7 + $0x20] sm:$0xf]
    %v158 = vld [vmem:[#allocation7 + $0x24] sm:$0xf]
    %v159 = vld [vmem:[#allocation7 + $0x28] sm:$0xf]
    %v160 = vld [vmem:[#allocation7 + $0x2c] sm:$0xf]
    %v161 = vld [vmem:[#allocation7 + $0x30] sm:$0xf]
    %v162 = vld [vmem:[#allocation7 + $0x34] sm:$0xf]
    %v163 = vld [vmem:[#allocation7 + $0x38] sm:$0xf]
    %v164 = vld [vmem:[#allocation7 + $0x3c] sm:$0xf]
    %v165 = vld [vmem:[%s4] sm:$0x1]
    %v167 = vlaneseq
    %v168 = vshrl.u32 %v167, 7
    %v169 = vsub.s32 0, %v168
    %v170 = vrot.slane %v165, %v169
    %v188 = vunpack.c.l.b16 %v149
    %v189 = vunpack.c.l.b16 %v150
    %v190 = vunpack.c.l.b16 %v151
    %v191 = vunpack.c.l.b16 %v152
    %v192 = vunpack.c.l.b16 %v153
    %v193 = vunpack.c.l.b16 %v154
    %v194 = vunpack.c.l.b16 %v155
    %v195 = vunpack.c.l.b16 %v156
    %v196 = vunpack.c.l.b16 %v157
    %v197 = vunpack.c.l.b16 %v158
    %v198 = vunpack.c.l.b16 %v159
    %v199 = vunpack.c.l.b16 %v160
    %v200 = vunpack.c.l.b16 %v161
    %v201 = vunpack.c.l.b16 %v162
    %v202 = vunpack.c.l.b16 %v163
    %v203 = vunpack.c.l.b16 %v164
    %v204 = vpack.c.b16 %v189, %v188
    %v205 = vpack.c.b16 %v191, %v190
    %v206 = vpack.c.b16 %v193, %v192
    %v207 = vpack.c.b16 %v195, %v194
    %v208 = vpack.c.b16 %v197, %v196
    %v209 = vpack.c.b16 %v199, %v198
    %v210 = vpack.c.b16 %v201, %v200
    %v211 = vpack.c.b16 %v203, %v202
    %220 = vmatprep.subr.bf16.mxu0 0
    %221 = vmatpush1.bf16.msra.mxu0 %v204
    %222 = vmatprep.subr.bf16.mxu0 0
    %223 = vmatpush1.bf16.msra.mxu0 %v205
    %224 = vmatprep.subr.bf16.mxu0 0
    %225 = vmatpush1.bf16.msra.mxu0 %v206
    %226 = vmatprep.subr.bf16.mxu0 0
    %227 = vmatpush1.bf16.msra.mxu0 %v207
    %228 = vmatprep.subr.bf16.mxu0 0
    %229 = vmatpush1.bf16.msra.mxu0 %v208
    %230 = vmatprep.subr.bf16.mxu0 0
    %231 = vmatpush1.bf16.msra.mxu0 %v209
    %232 = vmatprep.subr.bf16.mxu0 0
    %233 = vmatpush1.bf16.msra.mxu0 %v210
    %234 = vmatprep.subr.bf16.mxu0 0
    %235 = vmatpush1.bf16.msra.mxu0 %v211
    %236 = vmatprep.subr.bf16.mxu0 0
    %237 = vmatpush1.bf16.msra.mxu0 0
    %238 = vmatprep.subr.bf16.mxu0 0
    %239 = vmatpush1.bf16.msra.mxu0 0
    %240 = vmatprep.subr.bf16.mxu0 0
    %241 = vmatpush1.bf16.msra.mxu0 0
    %242 = vmatprep.subr.bf16.mxu0 0
    %243 = vmatpush1.bf16.msra.mxu0 0
    %244 = vmatprep.subr.bf16.mxu0 0
    %245 = vmatpush1.bf16.msra.mxu0 0
    %246 = vmatprep.subr.bf16.mxu0 0
    %247 = vmatpush1.bf16.msra.mxu0 0
    %248 = vmatprep.subr.bf16.mxu0 0
    %249 = vmatpush1.bf16.msra.mxu0 0
    %250 = vmatprep.subr.bf16.mxu0 0
    %251 = vmatpush1.bf16.msra.mxu0 0
    %252 = vmatprep.mubr.bf16.mxu0 0
    %253 = vmatmul.mubr.bf16.gmra.mrb[0].mxu0 %v148
    %v254 = vpop.f32.mrb[0].mxu0
    %v255 = vadd.f32 %v170, %v254
    %v256 = vpop.f32.mrb[0].mxu0
    %v257 = vpop.f32.mrb[0].mxu0
    %v258 = vadd.f32 %v170, %v257
    %v259 = vpop.f32.mrb[0].mxu0
    %260 = vdwg.mxu0
    %261 = vst [vmem:[#allocation8] sm:$0xff] %v255
    %262 = vst [vmem:[#allocation8 + $0x8] sm:$0xff] %v258
    // Predicated region
    $region34: #{tpu_custom_call.1} parent=1 // pred_check
      _
    $region35: #{tpu_custom_call.1} parent=1 // pred_check_branch
      %264 = sbr.rel (0) target = $region37
    $region36: #{tpu_custom_call.1} parent=1 // pred_region
      %s266 = ssub.s32 256, 256
      %267 = vsyncadd [#allocation4], %s266
      %s268 = sshll.u32 [#allocation8], 4
      %s269 = int_to_ptr.vmem [resolvable:$true] %s268
      %274 = dma.vmem_to_hbm [thread:$0]  %s269, 256, %s5, [#allocation4], 128, 128, 8
    $region37: #{tpu_custom_call.1} parent=1 // pred_fallthru
      _
    // Predicated region
    $region38: #{tpu_custom_call.1} parent=1 // pred_check
      _
    $region39: #{tpu_custom_call.1} parent=1 // pred_check_branch
      %276 = sbr.rel (0) target = $region41
    $region40: #{tpu_custom_call.1} parent=1 // pred_region
      %277 = dma.done [#allocation4], 256
    $region41: #{tpu_custom_call.1} parent=1 // pred_fallthru
      _
    %278 = vsyncpa [#allocation3], 1
    %279 = vsyncpa [#allocation6], 1
    %280 = vsyncpa [#allocation4], 1

// kernel: tpu_custom_call.1
$region0: #{tpu_custom_call.1}
  #allocation0 [shape = 'u32[]', space=smem, size = 0x4, offset = 0x4, fixed_abs, tag = 'smem constant byte address 0x4 - core index']
  #allocation1 [shape = 'u32[144,128]{1,0:T(1,128)}', space=vmem, size = 0x12000, scoped, tag = 'internal scratch']
  %s0 = inlined_call_operand.hbm [shape: bf16[16,32], index: 0, kind: input, shape index: {}]
  %s1 = inlined_call_operand.hbm [shape: bf16[32,128], index: 1, kind: input, shape index: {}]
  %s2 = inlined_call_operand.vmem [shape: f32[1,128], index: 2, kind: input, shape index: {}]
  %s3 = inlined_call_operand.hbm [shape: bf16[128,128], index: 3, kind: input, shape index: {}]
  %s4 = inlined_call_operand.vmem [shape: f32[1,128], index: 4, kind: input, shape index: {}]
  %s5 = inlined_call_operand.hbm [shape: f32[16,128], index: 5, kind: output, shape index: {}]
  %s6 = sld [smem:[#allocation0]]
  $region42: #{tpu_custom_call.1} parent=0
    _
  %s8 = ssub.s32 1, %s6
  %s9 = scalar_select 0, %s8, %s6
  $region1: #{tpu_custom_call.1} parent=0
    #allocation2 [shape = 'u8[4096]{0}', space=vmem, size = 0x1000, scoped, tag = 'input window, operand 0, single buffered']
    #allocation3 [shape = 's32[1]{0}', space=sflag, size = 0x4, scoped, tag = 'scoped memory for tpu_custom_call.1']
    #allocation4 [shape = 's32[1]{0}', space=sflag, size = 0x4, scoped, tag = 'scoped memory for tpu_custom_call.1']
    #allocation5 [shape = 'u8[8192]{0}', space=vmem, size = 0x2000, scoped, tag = 'input window, operand 1, single buffered']
    #allocation6 [shape = 's32[1]{0}', space=sflag, size = 0x4, scoped, tag = 'scoped memory for tpu_custom_call.1']
    #allocation7 [shape = 'u8[32768]{0}', space=vmem, size = 0x8000, scoped, tag = 'input window, operand 3, single buffered']
    #allocation8 [shape = 'u8[8192]{0}', space=vmem, size = 0x2000, scoped, tag = 'output window, operand 0, single buffered']
    %10 = vsyncpa [#allocation3], 0
    %11 = vsyncpa [#allocation6], 0
    %12 = vsyncpa [#allocation4], 0
    // Predicated region
    $region2: #{tpu_custom_call.1} parent=1 // pred_check
      _
    $region3: #{tpu_custom_call.1} parent=1 // pred_check_branch
      %14 = sbr.rel (0) target = $region5
    $region4: #{tpu_custom_call.1} parent=1 // pred_region
      %s16 = ssub.s32 128, 128
      %17 = vsyncadd [#allocation3], %s16
      %s18 = sshll.u32 [#allocation2], 4
      %s19 = int_to_ptr.vmem [resolvable:$true] %s18
      %24 = dma.hbm_to_vmem [thread:$0]  %s0, 128, %s19, [#allocation3], 64, 64, 4
    $region5: #{tpu_custom_call.1} parent=1 // pred_fallthru
      _
    // Predicated region
    $region6: #{tpu_custom_call.1} parent=1 // pred_check
      _
    $region7: #{tpu_custom_call.1} parent=1 // pred_check_branch
      %26 = sbr.rel (0) target = $region9
    $region8: #{tpu_custom_call.1} parent=1 // pred_region
      %s28 = ssub.s32 256, 256
      %29 = vsyncadd [#allocation6], %s28
      %s30 = sshll.u32 [#allocation5], 4
      %s31 = int_to_ptr.vmem [resolvable:$true] %s30
      %36 = dma.hbm_to_vmem [thread:$0]  %s1, 256, %s31, [#allocation6], 64, 64, 4
    $region9: #{tpu_custom_call.1} parent=1 // pred_fallthru
      _
    // Predicated region
    $region10: #{tpu_custom_call.1} parent=1 // pred_check
      _
    $region11: #{tpu_custom_call.1} parent=1 // pred_check_branch
      %38 = sbr.rel (0) target = $region13
    $region12: #{tpu_custom_call.1} parent=1 // pred_region
      _
    $region13: #{tpu_custom_call.1} parent=1 // pred_fallthru
      _
    // Predicated region
    $region14: #{tpu_custom_call.1} parent=1 // pred_check
      _
    $region15: #{tpu_custom_call.1} parent=1 // pred_check_branch
      %40 = sbr.rel (0) target = $region17
    $region16: #{tpu_custom_call.1} parent=1 // pred_region
      %s42 = ssub.s32 1024, 1024
      %43 = vsyncadd [#allocation6], %s42
      %s44 = sshll.u32 [#allocation7], 4
      %s45 = int_to_ptr.vmem [resolvable:$true] %s44
      %50 = dma.hbm_to_vmem [thread:$0]  %s3, 1024, %s45, [#allocation6], 64, 64, 4
    $region17: #{tpu_custom_call.1} parent=1 // pred_fallthru
      _
    // Predicated region
    $region18: #{tpu_custom_call.1} parent=1 // pred_check
      _
    $region19: #{tpu_custom_call.1} parent=1 // pred_check_branch
      %52 = sbr.rel (0) target = $region21
    $region20: #{tpu_custom_call.1} parent=1 // pred_region
      _
    $region21: #{tpu_custom_call.1} parent=1 // pred_fallthru
      _
    // Predicated region
    $region22: #{tpu_custom_call.1} parent=1 // pred_check
      _
    $region23: #{tpu_custom_call.1} parent=1 // pred_check_branch
      %54 = sbr.rel (0) target = $region25
    $region24: #{tpu_custom_call.1} parent=1 // pred_region
      %55 = dma.done [#allocation3], 128
    $region25: #{tpu_custom_call.1} parent=1 // pred_fallthru
      _
    // Predicated region
    $region26: #{tpu_custom_call.1} parent=1 // pred_check
      _
    $region27: #{tpu_custom_call.1} parent=1 // pred_check_branch
      %57 = sbr.rel (0) target = $region29
    $region28: #{tpu_custom_call.1} parent=1 // pred_region
      %58 = dma.done [#allocation6], 256
    $region29: #{tpu_custom_call.1} parent=1 // pred_fallthru
      _
    // Predicated region
    $region30: #{tpu_custom_call.1} parent=1 // pred_check
      _
    $region31: #{tpu_custom_call.1} parent=1 // pred_check_branch
      %60 = sbr.rel (0) target = $region33
    $region32: #{tpu_custom_call.1} parent=1 // pred_region
      %61 = dma.done [#allocation6], 1024
    $region33: #{tpu_custom_call.1} parent=1 // pred_fallthru
      _
    %v63 = vld [vmem:[#allocation2] sm:$0xf]
    %v64 = vld [vmem:[#allocation2 + $0x4] sm:$0xf]
    %v65 = vld [vmem:[#allocation5] sm:$0xf]
    %v66 = vld [vmem:[#allocation5 + $0x4] sm:$0xf]
    %v67 = vld [vmem:[#allocation5 + $0x8] sm:$0xf]
    %v68 = vld [vmem:[#allocation5 + $0xc] sm:$0xf]
    %v69 = vld [vmem:[%s2] sm:$0x1]
    %v71 = vlaneseq
    %v72 = vshrl.u32 %v71, 7
    %v73 = vsub.s32 0, %v72
    %v74 = vrot.slane %v69, %v73
    %v78 = vunpack.c.l.b16 %v63
    %v79 = vunpack.c.l.b16 %v64
    %v80 = vpack.c.b16 %v79, %v78
    %v85 = vunpack.c.l.b16 %v65
    %v86 = vunpack.c.l.b16 %v66
    %v87 = vunpack.c.l.b16 %v67
    %v88 = vunpack.c.l.b16 %v68
    %v89 = vpack.c.b16 %v86, %v85
    %v90 = vpack.c.b16 %v88, %v87
    %vm93 = vcmask 261120
    %v95 = vsel %vm93, %v80, 0
    %97 = vmatprep.subr.bf16.mxu0 0
    %98 = vmatpush1.bf16.msra.mxu0 %v89
    %99 = vmatprep.subr.bf16.mxu0 0
    %100 = vmatpush1.bf16.msra.mxu0 %v90
    %101 = vmatprep.subr.bf16.mxu0 0
    %102 = vmatpush1.bf16.msra.mxu0 0
    %103 = vmatprep.subr.bf16.mxu0 0
    %104 = vmatpush1.bf16.msra.mxu0 0
    %105 = vmatprep.subr.bf16.mxu0 0
    %106 = vmatpush1.bf16.msra.mxu0 0
    %107 = vmatprep.subr.bf16.mxu0 0
    %108 = vmatpush1.bf16.msra.mxu0 0
    %109 = vmatprep.subr.bf16.mxu0 0
    %110 = vmatpush1.bf16.msra.mxu0 0
    %111 = vmatprep.subr.bf16.mxu0 0
    %112 = vmatpush1.bf16.msra.mxu0 0
    %113 = vmatprep.subr.bf16.mxu0 0
    %114 = vmatpush1.bf16.msra.mxu0 0
    %115 = vmatprep.subr.bf16.mxu0 0
    %116 = vmatpush1.bf16.msra.mxu0 0
    %117 = vmatprep.subr.bf16.mxu0 0
    %118 = vmatpush1.bf16.msra.mxu0 0
    %119 = vmatprep.subr.bf16.mxu0 0
    %120 = vmatpush1.bf16.msra.mxu0 0
    %121 = vmatprep.subr.bf16.mxu0 0
    %122 = vmatpush1.bf16.msra.mxu0 0
    %123 = vmatprep.subr.bf16.mxu0 0
    %124 = vmatpush1.bf16.msra.mxu0 0
    %125 = vmatprep.subr.bf16.mxu0 0
    %126 = vmatpush1.bf16.msra.mxu0 0
    %127 = vmatprep.subr.bf16.mxu0 0
    %128 = vmatpush1.bf16.msra.mxu0 0
    %129 = vmatprep.mubr.bf16.mxu0 0
    %130 = vmatmul.mubr.bf16.gmra.mrb[0].mxu0 %v95
    %v131 = vpop.f32.mrb[0].mxu0
    %v132 = vadd.f32 %v74, %v131
    %v133 = vpop.f32.mrb[0].mxu0
    %v134 = vpop.f32.mrb[0].mxu0
    %v135 = vadd.f32 %v74, %v134
    %v136 = vpop.f32.mrb[0].mxu0
    %137 = vdwg.mxu0
    %v138 = vmul.f32 %v132, 0.5
    %v139 = vmul.f32 %v135, 0.5
    %v140 = vmul.f32 %v132, 0.70710677
    %v141 = vmul.f32 %v135, 0.70710677
    %v142 = verf.f32.pop %v140
    %v143 = verf.f32.pop %v141
    %v144 = vadd.f32 %v142, 1.0
    %v145 = vadd.f32 %v143, 1.0
    %v146 = vmul.f32 %v138, %v144
    %v147 = vmul.f32 %v139, %v145
    %v148 = vpack.c.bf16 %v147, %v146
    %v149 = vld [vmem:[#allocation7] sm:$0xf]
    %v150 = vld [vmem:[#allocation7 + $0x4] sm:$0xf]
    %v151 = vld [vmem:[#allocation7 + $0x8] sm:$0xf]
    %v152 = vld [vmem:[#allocation7 + $0xc] sm:$0xf]
    %v153 = vld [vmem:[#allocation7 + $0x10] sm:$0xf]
    %v154 = vld [vmem:[#allocation7 + $0x14] sm:$0xf]
    %v155 = vld [vmem:[#allocation7 + $0x18] sm:$0xf]
    %v156 = vld [vmem:[#allocation7 + $0x1c] sm:$0xf]
    %v157 = vld [vmem:[#allocation7 + $0x20] sm:$0xf]
    %v158 = vld [vmem:[#allocation7 + $0x24] sm:$0xf]
    %v159 = vld [vmem:[#allocation7 + $0x28] sm:$0xf]
    %v160 = vld [vmem:[#allocation7 + $0x2c] sm:$0xf]
    %v161 = vld [vmem:[#allocation7 + $0x30] sm:$0xf]
    %v162 = vld [vmem:[#allocation7 + $0x34] sm:$0xf]
    %v163 = vld [vmem:[#allocation7 + $0x38] sm:$0xf]
    %v164 = vld [vmem:[#allocation7 + $0x3c] sm:$0xf]
    %v165 = vld [vmem:[%s4] sm:$0x1]
    %v167 = vlaneseq
    %v168 = vshrl.u32 %v167, 7
    %v169 = vsub.s32 0, %v168
    %v170 = vrot.slane %v165, %v169
    %v188 = vunpack.c.l.b16 %v149
    %v189 = vunpack.c.l.b16 %v150
    %v190 = vunpack.c.l.b16 %v151
    %v191 = vunpack.c.l.b16 %v152
    %v192 = vunpack.c.l.b16 %v153
    %v193 = vunpack.c.l.b16 %v154
    %v194 = vunpack.c.l.b16 %v155
    %v195 = vunpack.c.l.b16 %v156
    %v196 = vunpack.c.l.b16 %v157
    %v197 = vunpack.c.l.b16 %v158
    %v198 = vunpack.c.l.b16 %v159
    %v199 = vunpack.c.l.b16 %v160
    %v200 = vunpack.c.l.b16 %v161
    %v201 = vunpack.c.l.b16 %v162
    %v202 = vunpack.c.l.b16 %v163
    %v203 = vunpack.c.l.b16 %v164
    %v204 = vpack.c.b16 %v189, %v188
    %v205 = vpack.c.b16 %v191, %v190
    %v206 = vpack.c.b16 %v193, %v192
    %v207 = vpack.c.b16 %v195, %v194
    %v208 = vpack.c.b16 %v197, %v196
    %v209 = vpack.c.b16 %v199, %v198
    %v210 = vpack.c.b16 %v201, %v200
    %v211 = vpack.c.b16 %v203, %v202
    %220 = vmatprep.subr.bf16.mxu0 0
    %221 = vmatpush1.bf16.msra.mxu0 %v204
    %222 = vmatprep.subr.bf16.mxu0 0
    %223 = vmatpush1.bf16.msra.mxu0 %v205
    %224 = vmatprep.subr.bf16.mxu0 0
    %225 = vmatpush1.bf16.msra.mxu0 %v206
    %226 = vmatprep.subr.bf16.mxu0 0
    %227 = vmatpush1.bf16.msra.mxu0 %v207
    %228 = vmatprep.subr.bf16.mxu0 0
    %229 = vmatpush1.bf16.msra.mxu0 %v208
    %230 = vmatprep.subr.bf16.mxu0 0
    %231 = vmatpush1.bf16.msra.mxu0 %v209
    %232 = vmatprep.subr.bf16.mxu0 0
    %233 = vmatpush1.bf16.msra.mxu0 %v210
    %234 = vmatprep.subr.bf16.mxu0 0
    %235 = vmatpush1.bf16.msra.mxu0 %v211
    %236 = vmatprep.subr.bf16.mxu0 0
    %237 = vmatpush1.bf16.msra.mxu0 0
    %238 = vmatprep.subr.bf16.mxu0 0
    %239 = vmatpush1.bf16.msra.mxu0 0
    %240 = vmatprep.subr.bf16.mxu0 0
    %241 = vmatpush1.bf16.msra.mxu0 0
    %242 = vmatprep.subr.bf16.mxu0 0
    %243 = vmatpush1.bf16.msra.mxu0 0
    %244 = vmatprep.subr.bf16.mxu0 0
    %245 = vmatpush1.bf16.msra.mxu0 0
    %246 = vmatprep.subr.bf16.mxu0 0
    %247 = vmatpush1.bf16.msra.mxu0 0
    %248 = vmatprep.subr.bf16.mxu0 0
    %249 = vmatpush1.bf16.msra.mxu0 0
    %250 = vmatprep.subr.bf16.mxu0 0
    %251 = vmatpush1.bf16.msra.mxu0 0
    %252 = vmatprep.mubr.bf16.mxu0 0
    %253 = vmatmul.mubr.bf16.gmra.mrb[0].mxu0 %v148
    %v254 = vpop.f32.mrb[0].mxu0
    %v255 = vadd.f32 %v170, %v254
    %v256 = vpop.f32.mrb[0].mxu0
    %v257 = vpop.f32.mrb[0].mxu0
    %v258 = vadd.f32 %v170, %v257
    %v259 = vpop.f32.mrb[0].mxu0
    %260 = vdwg.mxu0
    %261 = vst [vmem:[#allocation8] sm:$0xff] %v255
    %262 = vst [vmem:[#allocation8 + $0x8] sm:$0xff] %v258
    // Predicated region
    $region34: #{tpu_custom_call.1} parent=1 // pred_check
      _
    $region35: #{tpu_custom_call.1} parent=1 // pred_check_branch
      %264 = sbr.rel (0) target = $region37
    $region36: #{tpu_custom_call.1} parent=1 // pred_region
      %s266 = ssub.s32 256, 256
      %267 = vsyncadd [#allocation4], %s266
      %s268 = sshll.u32 [#allocation8], 4
      %s269 = int_to_ptr.vmem [resolvable:$true] %s268
      %274 = dma.vmem_to_hbm [thread:$0]  %s269, 256, %s5, [#allocation4], 128, 128, 8
    $region37: #{tpu_custom_call.1} parent=1 // pred_fallthru
      _
    // Predicated region
    $region38: #{tpu_custom_call.1} parent=1 // pred_check
      _
    $region39: #{tpu_custom_call.1} parent=1 // pred_check_branch
      %276 = sbr.rel (0) target = $region41
    $region40: #{tpu_custom_call.1} parent=1 // pred_region
      %277 = dma.done [#allocation4], 256
    $region41: #{tpu_custom_call.1} parent=1 // pred_fallthru
      _
    %278 = vsyncpa [#allocation3], 1
    %279 = vsyncpa [#allocation6], 1
    %280 = vsyncpa [#allocation4], 1

</llo_original>
